<compile_context>
chip_gen: v6e
topology: v6e:2x2x1
jax: 0.10.0
libtpu: 0.0.40
codegen_flags: <defaults>
</compile_context>

<pallas_src>
import jax
import jax.numpy as jnp
from jax.experimental import pallas as pl
from jax.experimental.pallas import tpu as pltpu

_INV_SQRT2 = 0.7071067811865476  # hoisted 1/sqrt(2)


def _intermediate_kernel(x_ref, w_ref, b_ref, o_ref):
    # Full-depth matmul on the MXU, f32 accumulation.
    z = jnp.dot(x_ref[...], w_ref[...], preferred_element_type=jnp.float32)
    z = z + b_ref[...].astype(jnp.float32)
    # Exact (erf-based) GELU, matching PyTorch's default / ACT2FN["gelu"].
    # TODO(synk): optionally switch to tanh-approx GELU (EUP slot) if the f32
    # erf polynomial ever becomes the saturating VALU slot on v6e/v7x.
    out = 0.5 * z * (1.0 + jax.lax.erf(z * _INV_SQRT2))
    o_ref[...] = out.astype(o_ref.dtype)


def _fit_tile(t, full, mult):
    """Clamp a requested tile to the array extent or a legal hardware multiple."""
    if t >= full:
        return full                      # full extent is always a legal block dim
    return max(mult, (t // mult) * mult)


def _physical_vmem_bytes():
    try:
        return int(pltpu.get_tpu_info().vmem_capacity_bytes)
    except Exception:
        return 64 * 1024 * 1024          # conservative default (v7x per-TC VMEM)


def lxmert_intermediate(hidden_states, weight, bias, *, tm=256, tn=1024,
                        mxu_dtype=jnp.bfloat16, out_dtype=None):
    """hidden_states: (B, S, H); weight: (H, I); bias: (I,). Returns (B, S, I).

    mxu_dtype: dtype for the MXU operands (default bf16; accumulation and the
    GELU epilogue remain f32). Pass None (or jnp.float32) for exact f32.
    out_dtype: output dtype (defaults to hidden_states.dtype).
    """
    B, S, H = hidden_states.shape
    I = weight.shape[1]
    out_dtype = hidden_states.dtype if out_dtype is None else out_dtype
    M = B * S

    x2d = hidden_states.reshape(M, H)
    if mxu_dtype is not None:
        x2d = x2d.astype(mxu_dtype)
        weight = weight.astype(mxu_dtype)
    b2d = bias.reshape(1, I)

    # Tile sizes: rows multiple of 8 sublanes, cols multiple of 128 lanes
    # (or the full extent).  Partial last blocks are masked by Pallas.
    tm = _fit_tile(tm, M, 8)
    tn = _fit_tile(tn, I, 128)

    x_b = jnp.dtype(x2d.dtype).itemsize
    w_b = jnp.dtype(weight.dtype).itemsize
    b_b = jnp.dtype(b2d.dtype).itemsize
    o_b = jnp.dtype(out_dtype).itemsize

    # Working-set estimate (conservative: assume everything double-buffered).
    def est(tm_, tn_):
        return (2 * tm_ * H * x_b + 2 * H * tn_ * w_b
                + 2 * tn_ * b_b + 2 * tm_ * tn_ * o_b)

    budget = int(_physical_vmem_bytes() * 0.8)   # headroom for Mosaic scratch
    while est(tm, tn) > budget:
        if tn > 128:
            tn = max(128, tn // 2)
        elif tm > 8:
            tm = max(8, ((tm // 2) // 8) * 8)
        else:
            break

    vmem_limit = int(min(budget, max(32 * 1024 * 1024, int(est(tm, tn) * 1.5))))

    num_m = pl.cdiv(M, tm)
    num_n = pl.cdiv(I, tn)
    # N axis OUTER, M axis INNER: the W column block index is constant across
    # the inner loop, so W is streamed from HBM exactly once; only the (much
    # smaller) X row stream repeats per column block.
    grid = (num_n, num_m)

    cost = pl.CostEstimate(
        flops=2 * M * H * I,
        transcendentals=M * I,
        bytes_accessed=M * H * x_b + H * I * w_b + I * b_b + M * I * o_b,
    )

    def build(single_buffer_weights):
        wkw = {"pipeline_mode": pl.Buffered(1)} if single_buffer_weights else {}
        grid_spec = pltpu.PrefetchScalarGridSpec(
            num_scalar_prefetch=0,
            grid=grid,
            in_specs=[
                pl.BlockSpec((tm, H), lambda j, i: (i, 0)),          # X row block
                pl.BlockSpec((H, tn), lambda j, i: (0, j), **wkw),   # W column block
                pl.BlockSpec((1, tn), lambda j, i: (0, j), **wkw),   # bias block
            ],
            out_specs=pl.BlockSpec((tm, tn), lambda j, i: (i, j)),
        )
        return pl.pallas_call(
            _intermediate_kernel,
            out_shape=jax.ShapeDtypeStruct((M, I), out_dtype),
            grid_spec=grid_spec,
            compiler_params=pltpu.CompilerParams(
                dimension_semantics=("parallel", "parallel"),
                vmem_limit_bytes=vmem_limit,
            ),
            cost_estimate=cost,
        )

    try:
        out = build(True)(x2d, weight, b2d)
    except Exception:
        # Single-buffered (pipeline_mode=pl.Buffered(1)) operands unsupported
        # on this jax version: fall back to default double-buffering.
        out = build(False)(x2d, weight, b2d)

    return out.reshape(B, S, I)


if __name__ == "__main__":
    # Small config consistent with an LXMERT-style transformer intermediate.
    batch, seq, hidden_size, intermediate_size = 2, 8, 32, 128

    key = jax.random.PRNGKey(0)
    kx, kw, kb = jax.random.split(key, 3)

    hidden_states = jax.random.normal(kx, (batch, seq, hidden_size), jnp.float32)
    # nn.Linear stores weight as (I, H); we keep the transposed (H, I) layout
    # so the kernel computes X @ W + b.
    weight = jax.random.normal(kw, (hidden_size, intermediate_size), jnp.float32) * 0.02
    bias = jax.random.normal(kb, (intermediate_size,), jnp.float32) * 0.02

    ref = jax.nn.gelu(hidden_states @ weight + bias, approximate=False)

    # Default path: bf16 MXU operands, f32 accumulation + f32 GELU epilogue.
    out = jax.block_until_ready(lxmert_intermediate(hidden_states, weight, bias))
    assert out.shape == (batch, seq, intermediate_size)
    assert jnp.allclose(out, ref, atol=2e-2, rtol=2e-2), "bf16 kernel mismatch vs reference"

    # Exact f32 MXU path (bit-faithful to the PyTorch module's numerics).
    out_f32 = jax.block_until_ready(
        lxmert_intermediate(hidden_states, weight, bias, mxu_dtype=None))
    assert jnp.allclose(out_f32, ref, atol=1e-5, rtol=1e-5), "f32 kernel mismatch vs reference"

    # Non-divisible M and a multi-block N grid: exercises the masked partial
    # last row block (no jnp.pad / slice HBM round trip).
    hs2 = jax.random.normal(kx, (2, 5, hidden_size), jnp.float32)
    w2 = jax.random.normal(kw, (hidden_size, 384), jnp.float32) * 0.02
    b2 = jax.random.normal(kb, (384,), jnp.float32) * 0.02
    ref2 = jax.nn.gelu(hs2 @ w2 + b2, approximate=False)
    out2 = jax.block_until_ready(
        lxmert_intermediate(hs2, w2, b2, tm=8, tn=128, mxu_dtype=None))
    assert out2.shape == (2, 5, 384)
    assert jnp.allclose(out2, ref2, atol=1e-5, rtol=1e-5), "partial-block kernel mismatch"

    print("KERNEL_OK")
</pallas_src>

<mosaic_0001>
module attributes {stable_mosaic.version = 11 : i64} {
  func.func @_intermediate_kernel(%arg0: i32, %arg1: i32, %arg2: memref<16x32xbf16, #tpu.memory_space<vmem>>, %arg3: memref<32x128xbf16, #tpu.memory_space<vmem>>, %arg4: memref<1x128xf32, #tpu.memory_space<vmem>>, %arg5: memref<16x128xf32, #tpu.memory_space<vmem>>) attributes {dimension_semantics = [#tpu.dimension_semantics<parallel>, #tpu.dimension_semantics<parallel>], iteration_bounds = array<i64: 1, 1>, scalar_prefetch = 0 : i64, scratch_operands = 0 : i64, tpu.core_type = #tpu.core_type<tc>, window_params = [{transform_indices = @transform_0, window_bounds = array<i64: 16, 32>}, {pipeline_mode = #tpu.pipeline_mode<synchronous>, transform_indices = @transform_1, window_bounds = array<i64: 32, 128>}, {pipeline_mode = #tpu.pipeline_mode<synchronous>, transform_indices = @transform_2, window_bounds = array<i64: 1, 128>}, {transform_indices = @transform_3, window_bounds = array<i64: 16, 128>}]} {
    %c0 = arith.constant 0 : index
    %c0_0 = arith.constant 0 : index
    %0 = vector.load %arg2[%c0, %c0_0] : memref<16x32xbf16, #tpu.memory_space<vmem>>, vector<16x32xbf16>
    %c0_1 = arith.constant 0 : index
    %c0_2 = arith.constant 0 : index
    %1 = vector.load %arg3[%c0_1, %c0_2] : memref<32x128xbf16, #tpu.memory_space<vmem>>, vector<32x128xbf16>
    %cst = arith.constant dense<0.000000e+00> : vector<16x128xf32>
    %2 = tpu.matmul %0, %1, %cst {dimension_numbers = #tpu.dot_dimension_numbers<[1], [0], [0], [1], [0, 0, 1, 1], [], []>} : vector<16x32xbf16>, vector<32x128xbf16>, vector<16x128xf32> -> vector<16x128xf32>
    %c0_3 = arith.constant 0 : index
    %c0_4 = arith.constant 0 : index
    %3 = vector.load %arg4[%c0_3, %c0_4] : memref<1x128xf32, #tpu.memory_space<vmem>>, vector<1x128xf32>
    %4 = vector.broadcast %3 : vector<1x128xf32> to vector<16x128xf32>
    %5 = arith.addf %2, %4 : vector<16x128xf32>
    %cst_5 = arith.constant 5.000000e-01 : f32
    %6 = vector.broadcast %cst_5 : f32 to vector<16x128xf32>
    %7 = arith.mulf %6, %5 : vector<16x128xf32>
    %cst_6 = arith.constant 0.707106769 : f32
    %8 = vector.broadcast %cst_6 : f32 to vector<16x128xf32>
    %9 = arith.mulf %5, %8 : vector<16x128xf32>
    %10 = math.erf %9 : vector<16x128xf32>
    %cst_7 = arith.constant 1.000000e+00 : f32
    %11 = vector.broadcast %cst_7 : f32 to vector<16x128xf32>
    %12 = arith.addf %11, %10 : vector<16x128xf32>
    %13 = arith.mulf %7, %12 : vector<16x128xf32>
    %c0_8 = arith.constant 0 : index
    %c0_9 = arith.constant 0 : index
    %14 = vector.load %arg5[%c0_8, %c0_9] : memref<16x128xf32, #tpu.memory_space<vmem>>, vector<16x128xf32>
    tpu.vector_store %arg5[%c0_8, %c0_9], %13 {strides = array<i32>} : memref<16x128xf32, #tpu.memory_space<vmem>>, vector<16x128xf32>,
    return
  }
  func.func @transform_0(%arg0: i32, %arg1: i32) -> (i32, i32) {
    %c0_i32 = arith.constant 0 : i32
    %c0_i32_0 = arith.constant 0 : i32
    return %arg1, %c0_i32 : i32, i32
  }
  func.func @transform_1(%arg0: i32, %arg1: i32) -> (i32, i32) {
    %c0_i32 = arith.constant 0 : i32
    %c0_i32_0 = arith.constant 0 : i32
    return %c0_i32, %arg0 : i32, i32
  }
  func.func @transform_2(%arg0: i32, %arg1: i32) -> (i32, i32) {
    %c0_i32 = arith.constant 0 : i32
    %c0_i32_0 = arith.constant 0 : i32
    return %c0_i32, %arg0 : i32, i32
  }
  func.func @transform_3(%arg0: i32, %arg1: i32) -> (i32, i32) {
    %c0_i32 = arith.constant 0 : i32
    return %arg1, %arg0 : i32, i32
  }
}

module attributes {stable_mosaic.version = 11 : i64} {
  func.func @_intermediate_kernel(%arg0: i32, %arg1: i32, %arg2: memref<16x32xbf16, #tpu.memory_space<vmem>>, %arg3: memref<32x128xbf16, #tpu.memory_space<vmem>>, %arg4: memref<1x128xf32, #tpu.memory_space<vmem>>, %arg5: memref<16x128xf32, #tpu.memory_space<vmem>>) attributes {dimension_semantics = [#tpu.dimension_semantics<parallel>, #tpu.dimension_semantics<parallel>], iteration_bounds = array<i64: 1, 1>, scalar_prefetch = 0 : i64, scratch_operands = 0 : i64, tpu.core_type = #tpu.core_type<tc>, window_params = [{transform_indices = @transform_0, window_bounds = array<i64: 16, 32>}, {transform_indices = @transform_1, window_bounds = array<i64: 32, 128>}, {transform_indices = @transform_2, window_bounds = array<i64: 1, 128>}, {transform_indices = @transform_3, window_bounds = array<i64: 16, 128>}]} {
    %c0 = arith.constant 0 : index
    %c0_0 = arith.constant 0 : index
    %0 = vector.load %arg2[%c0, %c0_0] : memref<16x32xbf16, #tpu.memory_space<vmem>>, vector<16x32xbf16>
    %c0_1 = arith.constant 0 : index
    %c0_2 = arith.constant 0 : index
    %1 = vector.load %arg3[%c0_1, %c0_2] : memref<32x128xbf16, #tpu.memory_space<vmem>>, vector<32x128xbf16>
    %cst = arith.constant dense<0.000000e+00> : vector<16x128xf32>
    %2 = tpu.matmul %0, %1, %cst {dimension_numbers = #tpu.dot_dimension_numbers<[1], [0], [0], [1], [0, 0, 1, 1], [], []>} : vector<16x32xbf16>, vector<32x128xbf16>, vector<16x128xf32> -> vector<16x128xf32>
    %c0_3 = arith.constant 0 : index
    %c0_4 = arith.constant 0 : index
    %3 = vector.load %arg4[%c0_3, %c0_4] : memref<1x128xf32, #tpu.memory_space<vmem>>, vector<1x128xf32>
    %4 = vector.broadcast %3 : vector<1x128xf32> to vector<16x128xf32>
    %5 = arith.addf %2, %4 : vector<16x128xf32>
    %cst_5 = arith.constant 5.000000e-01 : f32
    %6 = vector.broadcast %cst_5 : f32 to vector<16x128xf32>
    %7 = arith.mulf %6, %5 : vector<16x128xf32>
    %cst_6 = arith.constant 0.707106769 : f32
    %8 = vector.broadcast %cst_6 : f32 to vector<16x128xf32>
    %9 = arith.mulf %5, %8 : vector<16x128xf32>
    %10 = math.erf %9 : vector<16x128xf32>
    %cst_7 = arith.constant 1.000000e+00 : f32
    %11 = vector.broadcast %cst_7 : f32 to vector<16x128xf32>
    %12 = arith.addf %11, %10 : vector<16x128xf32>
    %13 = arith.mulf %7, %12 : vector<16x128xf32>
    %c0_8 = arith.constant 0 : index
    %c0_9 = arith.constant 0 : index
    %14 = vector.load %arg5[%c0_8, %c0_9] : memref<16x128xf32, #tpu.memory_space<vmem>>, vector<16x128xf32>
    tpu.vector_store %arg5[%c0_8, %c0_9], %13 {strides = array<i32>} : memref<16x128xf32, #tpu.memory_space<vmem>>, vector<16x128xf32>,
    return
  }
  func.func @transform_0(%arg0: i32, %arg1: i32) -> (i32, i32) {
    %c0_i32 = arith.constant 0 : i32
    %c0_i32_0 = arith.constant 0 : i32
    return %arg1, %c0_i32 : i32, i32
  }
  func.func @transform_1(%arg0: i32, %arg1: i32) -> (i32, i32) {
    %c0_i32 = arith.constant 0 : i32
    %c0_i32_0 = arith.constant 0 : i32
    return %c0_i32, %arg0 : i32, i32
  }
  func.func @transform_2(%arg0: i32, %arg1: i32) -> (i32, i32) {
    %c0_i32 = arith.constant 0 : i32
    %c0_i32_0 = arith.constant 0 : i32
    return %c0_i32, %arg0 : i32, i32
  }
  func.func @transform_3(%arg0: i32, %arg1: i32) -> (i32, i32) {
    %c0_i32 = arith.constant 0 : i32
    return %arg1, %arg0 : i32, i32
  }
}

</mosaic_0001>

<llo_original>
// kernel: tpu_custom_call.1
$region0: #{tpu_custom_call.1}
  #allocation0 [shape = 'u32[]', space=smem, size = 0x4, offset = 0x4, fixed_abs, tag = 'smem constant byte address 0x4 - core index']
  #allocation1 [shape = 'u32[144,128]{1,0:T(1,128)}', space=vmem, size = 0x12000, scoped, tag = 'internal scratch']
  %s0 = inlined_call_operand.hbm [shape: bf16[16,32], index: 0, kind: input, shape index: {}]
  %s1 = inlined_call_operand.hbm [shape: bf16[32,128], index: 1, kind: input, shape index: {}]
  %s2 = inlined_call_operand.vmem [shape: f32[1,128], index: 2, kind: input, shape index: {}]
  %s3 = inlined_call_operand.hbm [shape: f32[16,128], index: 3, kind: output, shape index: {}]
  %s4 = sld [smem:[#allocation0]]
  $region30: #{tpu_custom_call.1} parent=0
    _
  %s6 = ssub.s32 1, %s4
  %s7 = scalar_select 0, %s6, %s4
  $region1: #{tpu_custom_call.1} parent=0
    #allocation2 [shape = 'u8[4096]{0}', space=vmem, size = 0x1000, scoped, tag = 'input window, operand 0, single buffered']
    #allocation3 [shape = 's32[1]{0}', space=sflag, size = 0x4, scoped, tag = 'scoped memory for tpu_custom_call.1']
    #allocation4 [shape = 's32[1]{0}', space=sflag, size = 0x4, scoped, tag = 'scoped memory for tpu_custom_call.1']
    #allocation5 [shape = 'u8[8192]{0}', space=vmem, size = 0x2000, scoped, tag = 'input window, operand 1, single buffered']
    #allocation6 [shape = 's32[1]{0}', space=sflag, size = 0x4, scoped, tag = 'scoped memory for tpu_custom_call.1']
    #allocation7 [shape = 'u8[8192]{0}', space=vmem, size = 0x2000, scoped, tag = 'output window, operand 0, single buffered']
    %8 = vsyncpa [#allocation3], 0
    %9 = vsyncpa [#allocation6], 0
    %10 = vsyncpa [#allocation4], 0
    // Predicated region
    $region2: #{tpu_custom_call.1} parent=1 // pred_check
      _
    $region3: #{tpu_custom_call.1} parent=1 // pred_check_branch
      %12 = sbr.rel (0) target = $region5
    $region4: #{tpu_custom_call.1} parent=1 // pred_region
      %s14 = ssub.s32 128, 128
      %15 = vsyncadd [#allocation3], %s14
      %s16 = sshll.u32 [#allocation2], 4
      %s17 = int_to_ptr.vmem [resolvable:$true] %s16
      %22 = dma.hbm_to_vmem [thread:$0]  %s0, 128, %s17, [#allocation3], 64, 64, 4
    $region5: #{tpu_custom_call.1} parent=1 // pred_fallthru
      _
    // Predicated region
    $region6: #{tpu_custom_call.1} parent=1 // pred_check
      _
    $region7: #{tpu_custom_call.1} parent=1 // pred_check_branch
      %24 = sbr.rel (0) target = $region9
    $region8: #{tpu_custom_call.1} parent=1 // pred_region
      %s26 = ssub.s32 256, 256
      %27 = vsyncadd [#allocation6], %s26
      %s28 = sshll.u32 [#allocation5], 4
      %s29 = int_to_ptr.vmem [resolvable:$true] %s28
      %34 = dma.hbm_to_vmem [thread:$0]  %s1, 256, %s29, [#allocation6], 64, 64, 4
    $region9: #{tpu_custom_call.1} parent=1 // pred_fallthru
      _
    // Predicated region
    $region10: #{tpu_custom_call.1} parent=1 // pred_check
      _
    $region11: #{tpu_custom_call.1} parent=1 // pred_check_branch
      %36 = sbr.rel (0) target = $region13
    $region12: #{tpu_custom_call.1} parent=1 // pred_region
      _
    $region13: #{tpu_custom_call.1} parent=1 // pred_fallthru
      _
    // Predicated region
    $region14: #{tpu_custom_call.1} parent=1 // pred_check
      _
    $region15: #{tpu_custom_call.1} parent=1 // pred_check_branch
      %38 = sbr.rel (0) target = $region17
    $region16: #{tpu_custom_call.1} parent=1 // pred_region
      %39 = dma.done [#allocation3], 128
    $region17: #{tpu_custom_call.1} parent=1 // pred_fallthru
      _
    // Predicated region
    $region18: #{tpu_custom_call.1} parent=1 // pred_check
      _
    $region19: #{tpu_custom_call.1} parent=1 // pred_check_branch
      %41 = sbr.rel (0) target = $region21
    $region20: #{tpu_custom_call.1} parent=1 // pred_region
      %42 = dma.done [#allocation6], 256
    $region21: #{tpu_custom_call.1} parent=1 // pred_fallthru
      _
    %v44 = vld [vmem:[#allocation2] sm:$0xf]
    %v45 = vld [vmem:[#allocation2 + $0x4] sm:$0xf]
    %v46 = vld [vmem:[#allocation5] sm:$0xf]
    %v47 = vld [vmem:[#allocation5 + $0x4] sm:$0xf]
    %v48 = vld [vmem:[#allocation5 + $0x8] sm:$0xf]
    %v49 = vld [vmem:[#allocation5 + $0xc] sm:$0xf]
    %v50 = vld [vmem:[%s2] sm:$0x1]
    %v52 = vlaneseq
    %v53 = vshrl.u32 %v52, 7
    %v54 = vsub.s32 0, %v53
    %v55 = vrot.slane %v50, %v54
    %v59 = vunpack.c.l.b16 %v44
    %v60 = vunpack.c.l.b16 %v45
    %v61 = vpack.c.b16 %v60, %v59
    %v66 = vunpack.c.l.b16 %v46
    %v67 = vunpack.c.l.b16 %v47
    %v68 = vunpack.c.l.b16 %v48
    %v69 = vunpack.c.l.b16 %v49
    %v70 = vpack.c.b16 %v67, %v66
    %v71 = vpack.c.b16 %v69, %v68
    %vm74 = vcmask 261120
    %v76 = vsel %vm74, %v61, 0
    %78 = vmatprep.subr.bf16.mxu0 0
    %79 = vmatpush1.bf16.msra.mxu0 0
    %80 = vmatprep.subr.bf16.mxu0 0
    %81 = vmatpush1.bf16.msra.mxu0 0
    %82 = vmatprep.subr.bf16.mxu0 0
    %83 = vmatpush1.bf16.msra.mxu0 0
    %84 = vmatprep.subr.bf16.mxu0 0
    %85 = vmatpush1.bf16.msra.mxu0 0
    %86 = vmatprep.subr.bf16.mxu0 0
    %87 = vmatpush1.bf16.msra.mxu0 0
    %88 = vmatprep.subr.bf16.mxu0 0
    %89 = vmatpush1.bf16.msra.mxu0 0
    %90 = vmatprep.subr.bf16.mxu0 0
    %91 = vmatpush1.bf16.msra.mxu0 %v71
    %92 = vmatprep.subr.bf16.mxu0 0
    %93 = vmatpush1.bf16.msra.mxu0 %v70
    %94 = vmatprep.subr.bf16.mxu0 0
    %95 = vmatpush2.bf16.msra.mxu0 0
    %96 = vmatprep.subr.bf16.mxu0 0
    %97 = vmatpush2.bf16.msra.mxu0 0
    %98 = vmatprep.subr.bf16.mxu0 0
    %99 = vmatpush2.bf16.msra.mxu0 0
    %100 = vmatprep.subr.bf16.mxu0 0
    %101 = vmatpush2.bf16.msra.mxu0 0
    %102 = vmatprep.subr.bf16.mxu0 0
    %103 = vmatpush2.bf16.msra.mxu0 0
    %104 = vmatprep.subr.bf16.mxu0 0
    %105 = vmatpush2.bf16.msra.mxu0 0
    %106 = vmatprep.subr.bf16.mxu0 0
    %107 = vmatpush2.bf16.msra.mxu0 0
    %108 = vmatprep.subr.bf16.mxu0 0
    %109 = vmatpush2.bf16.msra.mxu0 0
    %110 = vmatprep.mubr.bf16.mxu0 0
    %111 = vmatmul.mubr.bf16.gmra.mxu0 %v76
    %v112 = vpop.f32.mrf.mxu0
    %v113 = vadd.f32 %v55, %v112
    %v114 = vpop.f32.mrf.mxu0
    %v115 = vpop.f32.mrf.mxu0
    %v116 = vadd.f32 %v55, %v115
    %v117 = vpop.f32.mrf.mxu0
    %118 = vdwg.mxu0
    %v119 = vmul.f32 %v113, 0.5
    %v120 = vmul.f32 %v116, 0.5
    %v121 = vmul.f32 %v113, 0.70710677
    %v122 = vmul.f32 %v116, 0.70710677
    %v123 = verf.f32.pop %v121
    %v124 = verf.f32.pop %v122
    %v125 = vadd.f32 %v123, 1.0
    %v126 = vadd.f32 %v124, 1.0
    %v127 = vmul.f32 %v119, %v125
    %v128 = vmul.f32 %v120, %v126
    %129 = vst [vmem:[#allocation7] sm:$0xff] %v127
    %130 = vst [vmem:[#allocation7 + $0x8] sm:$0xff] %v128
    // Predicated region
    $region22: #{tpu_custom_call.1} parent=1 // pred_check
      _
    $region23: #{tpu_custom_call.1} parent=1 // pred_check_branch
      %132 = sbr.rel (0) target = $region25
    $region24: #{tpu_custom_call.1} parent=1 // pred_region
      %s134 = ssub.s32 256, 256
      %135 = vsyncadd [#allocation4], %s134
      %s136 = sshll.u32 [#allocation7], 4
      %s137 = int_to_ptr.vmem [resolvable:$true] %s136
      %142 = dma.vmem_to_hbm [thread:$0]  %s137, 256, %s3, [#allocation4], 128, 128, 8
    $region25: #{tpu_custom_call.1} parent=1 // pred_fallthru
      _
    // Predicated region
    $region26: #{tpu_custom_call.1} parent=1 // pred_check
      _
    $region27: #{tpu_custom_call.1} parent=1 // pred_check_branch
      %144 = sbr.rel (0) target = $region29
    $region28: #{tpu_custom_call.1} parent=1 // pred_region
      %145 = dma.done [#allocation4], 256
    $region29: #{tpu_custom_call.1} parent=1 // pred_fallthru
      _
    %146 = vsyncpa [#allocation3], 1
    %147 = vsyncpa [#allocation6], 1
    %148 = vsyncpa [#allocation4], 1

// kernel: tpu_custom_call.1
$region0: #{tpu_custom_call.1}
  #allocation0 [shape = 'u32[]', space=smem, size = 0x4, offset = 0x4, fixed_abs, tag = 'smem constant byte address 0x4 - core index']
  #allocation1 [shape = 'u32[144,128]{1,0:T(1,128)}', space=vmem, size = 0x12000, scoped, tag = 'internal scratch']
  %s0 = inlined_call_operand.hbm [shape: bf16[16,32], index: 0, kind: input, shape index: {}]
  %s1 = inlined_call_operand.hbm [shape: bf16[32,128], index: 1, kind: input, shape index: {}]
  %s2 = inlined_call_operand.vmem [shape: f32[1,128], index: 2, kind: input, shape index: {}]
  %s3 = inlined_call_operand.hbm [shape: f32[16,128], index: 3, kind: output, shape index: {}]
  %s4 = sld [smem:[#allocation0]]
  $region30: #{tpu_custom_call.1} parent=0
    _
  %s6 = ssub.s32 1, %s4
  %s7 = scalar_select 0, %s6, %s4
  $region1: #{tpu_custom_call.1} parent=0
    #allocation2 [shape = 'u8[4096]{0}', space=vmem, size = 0x1000, scoped, tag = 'input window, operand 0, single buffered']
    #allocation3 [shape = 's32[1]{0}', space=sflag, size = 0x4, scoped, tag = 'scoped memory for tpu_custom_call.1']
    #allocation4 [shape = 's32[1]{0}', space=sflag, size = 0x4, scoped, tag = 'scoped memory for tpu_custom_call.1']
    #allocation5 [shape = 'u8[8192]{0}', space=vmem, size = 0x2000, scoped, tag = 'input window, operand 1, single buffered']
    #allocation6 [shape = 's32[1]{0}', space=sflag, size = 0x4, scoped, tag = 'scoped memory for tpu_custom_call.1']
    #allocation7 [shape = 'u8[8192]{0}', space=vmem, size = 0x2000, scoped, tag = 'output window, operand 0, single buffered']
    %8 = vsyncpa [#allocation3], 0
    %9 = vsyncpa [#allocation6], 0
    %10 = vsyncpa [#allocation4], 0
    // Predicated region
    $region2: #{tpu_custom_call.1} parent=1 // pred_check
      _
    $region3: #{tpu_custom_call.1} parent=1 // pred_check_branch
      %12 = sbr.rel (0) target = $region5
    $region4: #{tpu_custom_call.1} parent=1 // pred_region
      %s14 = ssub.s32 128, 128
      %15 = vsyncadd [#allocation3], %s14
      %s16 = sshll.u32 [#allocation2], 4
      %s17 = int_to_ptr.vmem [resolvable:$true] %s16
      %22 = dma.hbm_to_vmem [thread:$0]  %s0, 128, %s17, [#allocation3], 64, 64, 4
    $region5: #{tpu_custom_call.1} parent=1 // pred_fallthru
      _
    // Predicated region
    $region6: #{tpu_custom_call.1} parent=1 // pred_check
      _
    $region7: #{tpu_custom_call.1} parent=1 // pred_check_branch
      %24 = sbr.rel (0) target = $region9
    $region8: #{tpu_custom_call.1} parent=1 // pred_region
      %s26 = ssub.s32 256, 256
      %27 = vsyncadd [#allocation6], %s26
      %s28 = sshll.u32 [#allocation5], 4
      %s29 = int_to_ptr.vmem [resolvable:$true] %s28
      %34 = dma.hbm_to_vmem [thread:$0]  %s1, 256, %s29, [#allocation6], 64, 64, 4
    $region9: #{tpu_custom_call.1} parent=1 // pred_fallthru
      _
    // Predicated region
    $region10: #{tpu_custom_call.1} parent=1 // pred_check
      _
    $region11: #{tpu_custom_call.1} parent=1 // pred_check_branch
      %36 = sbr.rel (0) target = $region13
    $region12: #{tpu_custom_call.1} parent=1 // pred_region
      _
    $region13: #{tpu_custom_call.1} parent=1 // pred_fallthru
      _
    // Predicated region
    $region14: #{tpu_custom_call.1} parent=1 // pred_check
      _
    $region15: #{tpu_custom_call.1} parent=1 // pred_check_branch
      %38 = sbr.rel (0) target = $region17
    $region16: #{tpu_custom_call.1} parent=1 // pred_region
      %39 = dma.done [#allocation3], 128
    $region17: #{tpu_custom_call.1} parent=1 // pred_fallthru
      _
    // Predicated region
    $region18: #{tpu_custom_call.1} parent=1 // pred_check
      _
    $region19: #{tpu_custom_call.1} parent=1 // pred_check_branch
      %41 = sbr.rel (0) target = $region21
    $region20: #{tpu_custom_call.1} parent=1 // pred_region
      %42 = dma.done [#allocation6], 256
    $region21: #{tpu_custom_call.1} parent=1 // pred_fallthru
      _
    %v44 = vld [vmem:[#allocation2] sm:$0xf]
    %v45 = vld [vmem:[#allocation2 + $0x4] sm:$0xf]
    %v46 = vld [vmem:[#allocation5] sm:$0xf]
    %v47 = vld [vmem:[#allocation5 + $0x4] sm:$0xf]
    %v48 = vld [vmem:[#allocation5 + $0x8] sm:$0xf]
    %v49 = vld [vmem:[#allocation5 + $0xc] sm:$0xf]
    %v50 = vld [vmem:[%s2] sm:$0x1]
    %v52 = vlaneseq
    %v53 = vshrl.u32 %v52, 7
    %v54 = vsub.s32 0, %v53
    %v55 = vrot.slane %v50, %v54
    %v59 = vunpack.c.l.b16 %v44
    %v60 = vunpack.c.l.b16 %v45
    %v61 = vpack.c.b16 %v60, %v59
    %v66 = vunpack.c.l.b16 %v46
    %v67 = vunpack.c.l.b16 %v47
    %v68 = vunpack.c.l.b16 %v48
    %v69 = vunpack.c.l.b16 %v49
    %v70 = vpack.c.b16 %v67, %v66
    %v71 = vpack.c.b16 %v69, %v68
    %vm74 = vcmask 261120
    %v76 = vsel %vm74, %v61, 0
    %78 = vmatprep.subr.bf16.mxu0 0
    %79 = vmatpush1.bf16.msra.mxu0 0
    %80 = vmatprep.subr.bf16.mxu0 0
    %81 = vmatpush1.bf16.msra.mxu0 0
    %82 = vmatprep.subr.bf16.mxu0 0
    %83 = vmatpush1.bf16.msra.mxu0 0
    %84 = vmatprep.subr.bf16.mxu0 0
    %85 = vmatpush1.bf16.msra.mxu0 0
    %86 = vmatprep.subr.bf16.mxu0 0
    %87 = vmatpush1.bf16.msra.mxu0 0
    %88 = vmatprep.subr.bf16.mxu0 0
    %89 = vmatpush1.bf16.msra.mxu0 0
    %90 = vmatprep.subr.bf16.mxu0 0
    %91 = vmatpush1.bf16.msra.mxu0 %v71
    %92 = vmatprep.subr.bf16.mxu0 0
    %93 = vmatpush1.bf16.msra.mxu0 %v70
    %94 = vmatprep.subr.bf16.mxu0 0
    %95 = vmatpush2.bf16.msra.mxu0 0
    %96 = vmatprep.subr.bf16.mxu0 0
    %97 = vmatpush2.bf16.msra.mxu0 0
    %98 = vmatprep.subr.bf16.mxu0 0
    %99 = vmatpush2.bf16.msra.mxu0 0
    %100 = vmatprep.subr.bf16.mxu0 0
    %101 = vmatpush2.bf16.msra.mxu0 0
    %102 = vmatprep.subr.bf16.mxu0 0
    %103 = vmatpush2.bf16.msra.mxu0 0
    %104 = vmatprep.subr.bf16.mxu0 0
    %105 = vmatpush2.bf16.msra.mxu0 0
    %106 = vmatprep.subr.bf16.mxu0 0
    %107 = vmatpush2.bf16.msra.mxu0 0
    %108 = vmatprep.subr.bf16.mxu0 0
    %109 = vmatpush2.bf16.msra.mxu0 0
    %110 = vmatprep.mubr.bf16.mxu0 0
    %111 = vmatmul.mubr.bf16.gmra.mxu0 %v76
    %v112 = vpop.f32.mrf.mxu0
    %v113 = vadd.f32 %v55, %v112
    %v114 = vpop.f32.mrf.mxu0
    %v115 = vpop.f32.mrf.mxu0
    %v116 = vadd.f32 %v55, %v115
    %v117 = vpop.f32.mrf.mxu0
    %118 = vdwg.mxu0
    %v119 = vmul.f32 %v113, 0.5
    %v120 = vmul.f32 %v116, 0.5
    %v121 = vmul.f32 %v113, 0.70710677
    %v122 = vmul.f32 %v116, 0.70710677
    %v123 = verf.f32.pop %v121
    %v124 = verf.f32.pop %v122
    %v125 = vadd.f32 %v123, 1.0
    %v126 = vadd.f32 %v124, 1.0
    %v127 = vmul.f32 %v119, %v125
    %v128 = vmul.f32 %v120, %v126
    %129 = vst [vmem:[#allocation7] sm:$0xff] %v127
    %130 = vst [vmem:[#allocation7 + $0x8] sm:$0xff] %v128
    // Predicated region
    $region22: #{tpu_custom_call.1} parent=1 // pred_check
      _
    $region23: #{tpu_custom_call.1} parent=1 // pred_check_branch
      %132 = sbr.rel (0) target = $region25
    $region24: #{tpu_custom_call.1} parent=1 // pred_region
      %s134 = ssub.s32 256, 256
      %135 = vsyncadd [#allocation4], %s134
      %s136 = sshll.u32 [#allocation7], 4
      %s137 = int_to_ptr.vmem [resolvable:$true] %s136
      %142 = dma.vmem_to_hbm [thread:$0]  %s137, 256, %s3, [#allocation4], 128, 128, 8
    $region25: #{tpu_custom_call.1} parent=1 // pred_fallthru
      _
    // Predicated region
    $region26: #{tpu_custom_call.1} parent=1 // pred_check
      _
    $region27: #{tpu_custom_call.1} parent=1 // pred_check_branch
      %144 = sbr.rel (0) target = $region29
    $region28: #{tpu_custom_call.1} parent=1 // pred_region
      %145 = dma.done [#allocation4], 256
    $region29: #{tpu_custom_call.1} parent=1 // pred_fallthru
      _
    %146 = vsyncpa [#allocation3], 1
    %147 = vsyncpa [#allocation6], 1
    %148 = vsyncpa [#allocation4], 1

</llo_original>
